<compile_context>
chip_gen: v5e
topology: v5e:2x2
jax: 0.10.0
libtpu: 0.0.40
codegen_flags: <defaults>
</compile_context>

<pallas_src>
import functools

import jax
import jax.numpy as jnp
from jax import lax
from jax.experimental import pallas as pl
from jax.experimental.pallas import tpu as pltpu

LN_EPS = 1e-5


def _phi3_kernel(x_ref, avg_ref, w1_ref, b1_ref, w2_ref, b2_ref, o_ref):
    """Fused LN -> Linear -> ReLU -> LN -> Linear on packed (row-group) lanes.

    x_ref:   (tile, pack*H) f32   input rows, `pack` logical rows per vreg row
    avg_ref: (pack*H, pack*H) bf16 block-diagonal 1/H averaging matrix
    w1_ref:  (pack*H, pack*H) bf16 block-diagonal Linear1 (LN1 affine folded)
    b1_ref:  (1, pack*H) f32
    w2_ref:  (pack*H, pack*C) bf16 block-diagonal Linear2 (LN2 affine folded)
    b2_ref:  (1, pack*C) f32
    o_ref:   (tile, pack*C) f32
    """
    x = x_ref[...].astype(jnp.float32)
    avg = avg_ref[...]  # entries are 0 or 1/H; 1/32 is exact in bf16

    # ---- Segmented LayerNorm 1 (per H-lane group, stats via MXU matmul) ----
    mu1 = jnp.dot(x.astype(avg.dtype), avg, preferred_element_type=jnp.float32)
    xc = x - mu1
    var1 = jnp.dot((xc * xc).astype(avg.dtype), avg,
                   preferred_element_type=jnp.float32)
    xn = xc * lax.rsqrt(var1 + LN_EPS)

    # ---- Linear(H, H) + bias + ReLU (bf16 operands, f32 accumulation) ----
    h = jnp.dot(xn.astype(w1_ref.dtype), w1_ref[...],
                preferred_element_type=jnp.float32)
    h = jnp.maximum(h + b1_ref[...], 0.0)

    # ---- Segmented LayerNorm 2 ----
    mu2 = jnp.dot(h.astype(avg.dtype), avg, preferred_element_type=jnp.float32)
    hc = h - mu2
    var2 = jnp.dot((hc * hc).astype(avg.dtype), avg,
                   preferred_element_type=jnp.float32)
    hn = hc * lax.rsqrt(var2 + LN_EPS)

    # ---- Linear(H, C) + bias (no class-dim padding; lane-packed groups) ----
    out = jnp.dot(hn.astype(w2_ref.dtype), w2_ref[...],
                  preferred_element_type=jnp.float32)
    o_ref[...] = (out + b2_ref[...]).astype(o_ref.dtype)


def _round_up(x, m):
    return ((x + m - 1) // m) * m


def _vmem_tile_bytes(rows, cols, itemsize, bufs=2):
    # Real VMEM layout: sublanes padded to 8, lanes padded to 128.
    return bufs * _round_up(rows, 8) * _round_up(cols, 128) * itemsize


def _working_set_bytes(tile_rows, hp, cp):
    b = _vmem_tile_bytes(tile_rows, hp, 4)    # x tile (f32), double-buffered
    b += _vmem_tile_bytes(tile_rows, cp, 4)   # out tile (f32), double-buffered
    b += _vmem_tile_bytes(hp, hp, 2)          # averaging matrix (bf16)
    b += _vmem_tile_bytes(hp, hp, 2)          # W1 block-diag (bf16)
    b += _vmem_tile_bytes(1, hp, 4)           # b1 (f32)
    b += _vmem_tile_bytes(hp, cp, 2)          # W2 block-diag (bf16)
    b += _vmem_tile_bytes(1, cp, 4)           # b2 (f32)
    return b


def _tensorcores_per_chip():
    """Best-effort TensorCore count (v7x = 2, v5e/v6e = 1). Defaults to 1."""
    try:
        info = pltpu.get_tpu_info()
        for name in ("num_cores", "num_tensorcores", "tensorcores_per_chip",
                     "cores_per_chip"):
            v = getattr(info, name, None)
            if isinstance(v, int) and v > 0:
                return v
    except Exception:
        pass
    try:
        v = getattr(jax.devices()[0], "num_cores", None)
        if isinstance(v, int) and v > 0:
            return v
    except Exception:
        pass
    return 1


def _pick_tile_rows(rows_pk, hp, cp, num_cores,
                    target=1024, vmem_budget=24 << 20):
    rows8 = _round_up(max(rows_pk, 1), 8)
    t = max(8, (min(rows8, target) // 8) * 8)
    # Megacore (v7x): aim for >= 2 grid steps per core when rows allow, so
    # each core keeps DMA/compute overlap.  On single-core chips a small
    # input runs as one grid step (no wasted step overhead); large inputs get
    # multiple steps automatically via the target cap.
    if num_cores > 1:
        min_steps = 2 * num_cores
        if rows8 >= min_steps * 8:
            t = min(t, max(8, ((rows8 // min_steps) // 8) * 8))
    # Shrink until the double-buffered working set fits the VMEM budget.
    while t > 8 and _working_set_bytes(t, hp, cp) > vmem_budget:
        t -= 8
    return t


@functools.partial(jax.jit, static_argnames=("tile_rows",))
def rodt_forest_bagging_forward(F, params, *, tile_rows=None):
    """F: (B, S, H) float32 -> (B, S, C). Inference (dropout = identity)."""
    B, S, H = F.shape
    C = params["w2"].shape[1]
    rows = B * S

    # ---- Fold LayerNorm affines into the following Linear (wrapper-time) ----
    #   (LN(x) * g + be) @ W + b  ==  LN(x) @ (diag(g) @ W) + (be @ W + b)
    w1 = params["ln1_gamma"][:, None] * params["w1"]
    b1 = params["ln1_beta"] @ params["w1"] + params["b1"]
    w2 = params["ln2_gamma"][:, None] * params["w2"]
    b2 = params["ln2_beta"] @ params["w2"] + params["b2"]

    # ---- Lane-dense packing: `pack` logical rows per 128-lane vreg row ----
    pack = (128 // H) if (H < 128 and 128 % H == 0) else 1
    Hp, Cp = pack * H, pack * C

    eye = jnp.eye(pack, dtype=jnp.float32)
    w1bd = jnp.kron(eye, w1).astype(jnp.bfloat16)                  # (Hp, Hp)
    w2bd = jnp.kron(eye, w2).astype(jnp.bfloat16)                  # (Hp, Cp)
    avg = jnp.kron(eye, jnp.full((H, H), 1.0 / H, jnp.float32))    # (Hp, Hp)
    avg = avg.astype(jnp.bfloat16)                                 # 1/H exact
    b1p = jnp.tile(b1, pack).reshape(1, Hp).astype(jnp.float32)
    b2p = jnp.tile(b2, pack).reshape(1, Cp).astype(jnp.float32)

    # ---- Pack input rows: (rows, H) -> (rows_pk, pack*H), contiguous ----
    x2d = F.reshape(rows, H)
    rows_pk = -(-rows // pack)
    if rows_pk * pack != rows:
        x2d = jnp.pad(x2d, ((0, rows_pk * pack - rows), (0, 0)))
    x_pk = x2d.reshape(rows_pk, Hp)

    # ---- Row tiling (multiple of 8 sublanes, VMEM-capped, core-aware) ----
    num_cores = _tensorcores_per_chip()
    if tile_rows is None:
        tile_rows = _pick_tile_rows(rows_pk, Hp, Cp, num_cores)
    assert tile_rows >= 8 and tile_rows % 8 == 0
    rows_pk_pad = _round_up(rows_pk, tile_rows)
    if rows_pk_pad != rows_pk:
        x_pk = jnp.pad(x_pk, ((0, rows_pk_pad - rows_pk), (0, 0)))
    grid = (rows_pk_pad // tile_rows,)

    # ---- VMEM budget from corrected accounting; <= 56 MiB (v7x headroom) ----
    need = _working_set_bytes(tile_rows, Hp, Cp)
    vmem_limit = int(min(56 << 20, max(16 << 20, 2 * need)))

    out_pk = pl.pallas_call(
        _phi3_kernel,
        out_shape=jax.ShapeDtypeStruct((rows_pk_pad, Cp), F.dtype),
        grid_spec=pltpu.PrefetchScalarGridSpec(
            num_scalar_prefetch=0,
            grid=grid,
            in_specs=[
                pl.BlockSpec((tile_rows, Hp), lambda i: (i, 0)),  # x row tile
                pl.BlockSpec((Hp, Hp), lambda i: (0, 0)),         # avg matrix
                pl.BlockSpec((Hp, Hp), lambda i: (0, 0)),         # W1 blockdiag
                pl.BlockSpec((1, Hp), lambda i: (0, 0)),          # b1
                pl.BlockSpec((Hp, Cp), lambda i: (0, 0)),         # W2 blockdiag
                pl.BlockSpec((1, Cp), lambda i: (0, 0)),          # b2
            ],
            out_specs=pl.BlockSpec((tile_rows, Cp), lambda i: (i, 0)),
        ),
        compiler_params=pltpu.CompilerParams(
            dimension_semantics=("parallel",),
            vmem_limit_bytes=vmem_limit,
        ),
    )(x_pk, avg, w1bd, b1p, w2bd, b2p)

    # Unpack: (rows_pk, pack*C) -> (rows, C) -> (B, S, C)
    out2d = out_pk[:rows_pk].reshape(rows_pk * pack, C)[:rows]
    return out2d.reshape(B, S, C)


def init_params(key, n_hidden, n_class):
    """Deterministic synthetic parameters matching nn.Module shapes."""
    ks = jax.random.split(key, 8)
    bound1 = 1.0 / jnp.sqrt(n_hidden)
    # nn.Linear stores weight as (out, in); we keep (in, out) for x @ W.
    w1 = jax.random.uniform(ks[0], (n_hidden, n_hidden), jnp.float32,
                            -bound1, bound1)
    b1 = jax.random.uniform(ks[1], (n_hidden,), jnp.float32, -bound1, bound1)
    w2 = jax.random.uniform(ks[2], (n_hidden, n_class), jnp.float32,
                            -bound1, bound1)
    b2 = jax.random.uniform(ks[3], (n_class,), jnp.float32, -bound1, bound1)
    return {
        # Random (non-default) LN affine params so the wrapper-time folding
        # into W/b is actually exercised by the correctness check.
        "ln1_gamma": 1.0 + 0.1 * jax.random.normal(ks[4], (n_hidden,), jnp.float32),
        "ln1_beta": 0.1 * jax.random.normal(ks[5], (n_hidden,), jnp.float32),
        "ln2_gamma": 1.0 + 0.1 * jax.random.normal(ks[6], (n_hidden,), jnp.float32),
        "ln2_beta": 0.1 * jax.random.normal(ks[7], (n_hidden,), jnp.float32),
        "w1": w1, "b1": b1, "w2": w2, "b2": b2,
    }


def _reference(F, p):
    def ln(x, g, b):
        mu = jnp.mean(x, axis=-1, keepdims=True)
        var = jnp.mean(jnp.square(x - mu), axis=-1, keepdims=True)
        return (x - mu) / jnp.sqrt(var + LN_EPS) * g + b
    hp = lax.Precision.HIGHEST
    x = ln(F, p["ln1_gamma"], p["ln1_beta"])
    x = jnp.maximum(jnp.dot(x, p["w1"], precision=hp) + p["b1"], 0.0)
    x = ln(x, p["ln2_gamma"], p["ln2_beta"])
    return jnp.dot(x, p["w2"], precision=hp) + p["b2"]


if __name__ == "__main__":
    B, S, H, C = 2, 8, 32, 4   # batch, #rODT-forests, n_hidden, n_class
    key = jax.random.PRNGKey(0)
    kx, kp = jax.random.split(key)
    F_in = jax.random.normal(kx, (B, S, H), jnp.float32)
    params = init_params(kp, H, C)
    ref = _reference(F_in, params)

    out = jax.block_until_ready(rodt_forest_bagging_forward(F_in, params))

    assert out.shape == (B, S, C), out.shape
    # bf16 MXU operands with f32 accumulation; checked against f32 HIGHEST ref.
    err = float(jnp.max(jnp.abs(out - ref)))
    assert jnp.allclose(out, ref, atol=5e-2, rtol=5e-2), err

    print("KERNEL_OK")
</pallas_src>

<mosaic_0001>
module attributes {stable_mosaic.version = 11 : i64} {
  func.func @_phi3_kernel(%arg0: i32, %arg1: memref<8x128xf32, #tpu.memory_space<vmem>>, %arg2: memref<128x128xbf16, #tpu.memory_space<vmem>>, %arg3: memref<128x128xbf16, #tpu.memory_space<vmem>>, %arg4: memref<1x128xf32, #tpu.memory_space<vmem>>, %arg5: memref<128x16xbf16, #tpu.memory_space<vmem>>, %arg6: memref<1x16xf32, #tpu.memory_space<vmem>>, %arg7: memref<8x16xf32, #tpu.memory_space<vmem>>) attributes {dimension_semantics = [#tpu.dimension_semantics<parallel>], iteration_bounds = array<i64: 1>, scalar_prefetch = 0 : i64, scratch_operands = 0 : i64, tpu.core_type = #tpu.core_type<tc>, window_params = [{transform_indices = @transform_0, window_bounds = array<i64: 8, 128>}, {pipeline_mode = #tpu.pipeline_mode<synchronous>, transform_indices = @transform_1, window_bounds = array<i64: 128, 128>}, {pipeline_mode = #tpu.pipeline_mode<synchronous>, transform_indices = @transform_2, window_bounds = array<i64: 128, 128>}, {pipeline_mode = #tpu.pipeline_mode<synchronous>, transform_indices = @transform_3, window_bounds = array<i64: 1, 128>}, {pipeline_mode = #tpu.pipeline_mode<synchronous>, transform_indices = @transform_4, window_bounds = array<i64: 128, 16>}, {pipeline_mode = #tpu.pipeline_mode<synchronous>, transform_indices = @transform_5, window_bounds = array<i64: 1, 16>}, {transform_indices = @transform_6, window_bounds = array<i64: 8, 16>}]} {
    %c0 = arith.constant 0 : index
    %c0_0 = arith.constant 0 : index
    %0 = vector.load %arg1[%c0, %c0_0] : memref<8x128xf32, #tpu.memory_space<vmem>>, vector<8x128xf32>
    %c0_1 = arith.constant 0 : index
    %c0_2 = arith.constant 0 : index
    %1 = vector.load %arg2[%c0_1, %c0_2] : memref<128x128xbf16, #tpu.memory_space<vmem>>, vector<128x128xbf16>
    %2 = arith.truncf %0 : vector<8x128xf32> to vector<8x128xbf16>
    %cst = arith.constant dense<0.000000e+00> : vector<8x128xf32>
    %3 = tpu.matmul %2, %1, %cst {dimension_numbers = #tpu.dot_dimension_numbers<[1], [0], [0], [1], [0, 0, 1, 1], [], []>} : vector<8x128xbf16>, vector<128x128xbf16>, vector<8x128xf32> -> vector<8x128xf32>
    %4 = arith.subf %0, %3 : vector<8x128xf32>
    %5 = arith.mulf %4, %4 : vector<8x128xf32>
    %6 = arith.truncf %5 : vector<8x128xf32> to vector<8x128xbf16>
    %cst_3 = arith.constant dense<0.000000e+00> : vector<8x128xf32>
    %7 = tpu.matmul %6, %1, %cst_3 {dimension_numbers = #tpu.dot_dimension_numbers<[1], [0], [0], [1], [0, 0, 1, 1], [], []>} : vector<8x128xbf16>, vector<128x128xbf16>, vector<8x128xf32> -> vector<8x128xf32>
    %cst_4 = arith.constant 9.99999974E-6 : f32
    %8 = vector.broadcast %cst_4 : f32 to vector<8x128xf32>
    %9 = arith.addf %7, %8 : vector<8x128xf32>
    %10 = math.rsqrt %9 : vector<8x128xf32>
    %11 = arith.mulf %4, %10 : vector<8x128xf32>
    %12 = arith.truncf %11 : vector<8x128xf32> to vector<8x128xbf16>
    %c0_5 = arith.constant 0 : index
    %c0_6 = arith.constant 0 : index
    %13 = vector.load %arg3[%c0_5, %c0_6] : memref<128x128xbf16, #tpu.memory_space<vmem>>, vector<128x128xbf16>
    %cst_7 = arith.constant dense<0.000000e+00> : vector<8x128xf32>
    %14 = tpu.matmul %12, %13, %cst_7 {dimension_numbers = #tpu.dot_dimension_numbers<[1], [0], [0], [1], [0, 0, 1, 1], [], []>} : vector<8x128xbf16>, vector<128x128xbf16>, vector<8x128xf32> -> vector<8x128xf32>
    %c0_8 = arith.constant 0 : index
    %c0_9 = arith.constant 0 : index
    %15 = vector.load %arg4[%c0_8, %c0_9] : memref<1x128xf32, #tpu.memory_space<vmem>>, vector<1x128xf32>
    %16 = vector.broadcast %15 : vector<1x128xf32> to vector<8x128xf32>
    %17 = arith.addf %14, %16 : vector<8x128xf32>
    %cst_10 = arith.constant 0.000000e+00 : f32
    %18 = vector.broadcast %cst_10 : f32 to vector<8x128xf32>
    %19 = arith.maximumf %17, %18 : vector<8x128xf32>
    %20 = arith.truncf %19 : vector<8x128xf32> to vector<8x128xbf16>
    %cst_11 = arith.constant dense<0.000000e+00> : vector<8x128xf32>
    %21 = tpu.matmul %20, %1, %cst_11 {dimension_numbers = #tpu.dot_dimension_numbers<[1], [0], [0], [1], [0, 0, 1, 1], [], []>} : vector<8x128xbf16>, vector<128x128xbf16>, vector<8x128xf32> -> vector<8x128xf32>
    %22 = arith.subf %19, %21 : vector<8x128xf32>
    %23 = arith.mulf %22, %22 : vector<8x128xf32>
    %24 = arith.truncf %23 : vector<8x128xf32> to vector<8x128xbf16>
    %cst_12 = arith.constant dense<0.000000e+00> : vector<8x128xf32>
    %25 = tpu.matmul %24, %1, %cst_12 {dimension_numbers = #tpu.dot_dimension_numbers<[1], [0], [0], [1], [0, 0, 1, 1], [], []>} : vector<8x128xbf16>, vector<128x128xbf16>, vector<8x128xf32> -> vector<8x128xf32>
    %cst_13 = arith.constant 9.99999974E-6 : f32
    %26 = vector.broadcast %cst_13 : f32 to vector<8x128xf32>
    %27 = arith.addf %25, %26 : vector<8x128xf32>
    %28 = math.rsqrt %27 : vector<8x128xf32>
    %29 = arith.mulf %22, %28 : vector<8x128xf32>
    %30 = arith.truncf %29 : vector<8x128xf32> to vector<8x128xbf16>
    %c0_14 = arith.constant 0 : index
    %c0_15 = arith.constant 0 : index
    %31 = vector.load %arg5[%c0_14, %c0_15] : memref<128x16xbf16, #tpu.memory_space<vmem>>, vector<128x16xbf16>
    %cst_16 = arith.constant dense<0.000000e+00> : vector<8x16xf32>
    %32 = tpu.matmul %30, %31, %cst_16 {dimension_numbers = #tpu.dot_dimension_numbers<[1], [0], [0], [1], [0, 0, 1, 1], [], []>} : vector<8x128xbf16>, vector<128x16xbf16>, vector<8x16xf32> -> vector<8x16xf32>
    %c0_17 = arith.constant 0 : index
    %c0_18 = arith.constant 0 : index
    %33 = vector.load %arg6[%c0_17, %c0_18] : memref<1x16xf32, #tpu.memory_space<vmem>>, vector<1x16xf32>
    %34 = vector.broadcast %33 : vector<1x16xf32> to vector<8x16xf32>
    %35 = arith.addf %32, %34 : vector<8x16xf32>
    %c0_19 = arith.constant 0 : index
    %c0_20 = arith.constant 0 : index
    %36 = vector.load %arg7[%c0_19, %c0_20] : memref<8x16xf32, #tpu.memory_space<vmem>>, vector<8x16xf32>
    tpu.vector_store %arg7[%c0_19, %c0_20], %35 {strides = array<i32>} : memref<8x16xf32, #tpu.memory_space<vmem>>, vector<8x16xf32>,
    return
  }
  func.func @transform_0(%arg0: i32) -> (i32, i32) {
    %c0_i32 = arith.constant 0 : i32
    %c0_i32_0 = arith.constant 0 : i32
    return %arg0, %c0_i32 : i32, i32
  }
  func.func @transform_1(%arg0: i32) -> (i32, i32) {
    %c0_i32 = arith.constant 0 : i32
    %c0_i32_0 = arith.constant 0 : i32
    %c0_i32_1 = arith.constant 0 : i32
    return %c0_i32, %c0_i32_0 : i32, i32
  }
  func.func @transform_2(%arg0: i32) -> (i32, i32) {
    %c0_i32 = arith.constant 0 : i32
    %c0_i32_0 = arith.constant 0 : i32
    %c0_i32_1 = arith.constant 0 : i32
    return %c0_i32, %c0_i32_0 : i32, i32
  }
  func.func @transform_3(%arg0: i32) -> (i32, i32) {
    %c0_i32 = arith.constant 0 : i32
    %c0_i32_0 = arith.constant 0 : i32
    %c0_i32_1 = arith.constant 0 : i32
    return %c0_i32, %c0_i32_0 : i32, i32
  }
  func.func @transform_4(%arg0: i32) -> (i32, i32) {
    %c0_i32 = arith.constant 0 : i32
    %c0_i32_0 = arith.constant 0 : i32
    %c0_i32_1 = arith.constant 0 : i32
    return %c0_i32, %c0_i32_0 : i32, i32
  }
  func.func @transform_5(%arg0: i32) -> (i32, i32) {
    %c0_i32 = arith.constant 0 : i32
    %c0_i32_0 = arith.constant 0 : i32
    %c0_i32_1 = arith.constant 0 : i32
    return %c0_i32, %c0_i32_0 : i32, i32
  }
  func.func @transform_6(%arg0: i32) -> (i32, i32) {
    %c0_i32 = arith.constant 0 : i32
    %c0_i32_0 = arith.constant 0 : i32
    return %arg0, %c0_i32 : i32, i32
  }
}

</mosaic_0001>

<llo_original>
// kernel: tile.13
$region0: #{tile.13}
  #allocation0 [shape = 's32[1]{0}', space=sflag, size = 0x4, scoped, tag = 'scoped memory for tile.13']
  %s0 = inlined_call_operand.vmem [shape: f32[32], index: 0, kind: input, shape index: {}]
  %s1 = inlined_call_operand.vmem [shape: f32[4,32], index: 1, kind: output, shape index: {}]
  // Predicated region
  $region2: #{tile.13} parent=0 // pred_check
    _
  $region3: #{tile.13} parent=0 // pred_check_branch
    %3 = sbr.rel (0) target = $region5
  $region4: #{tile.13} parent=0 // pred_region
    _
  $region5: #{tile.13} parent=0 // pred_fallthru
    _
  %v4 = vld [vmem:[%s0] ss:$0 sm:$0xff]
  %5 = vst [vmem:[%s1] sm:$0xf] %v4

// kernel: tile.14
$region0: #{tile.14}
  %s0 = inlined_call_operand.vmem [shape: f32[4,32], index: 0, kind: input, shape index: {}]
  %s1 = inlined_call_operand.vmem [shape: f32[1,128], index: 1, kind: output, shape index: {}]
  $region1: #{tile.14} parent=0
    #allocation0 [shape = 'u8[4096]{0}', space=vmem, size = 0x1000, scoped, tag = 'scoped mem for output reshape']
    #allocation1 [shape = 'u8[4096]{0}', space=vmem, size = 0x1000, scoped, tag = 'scoped mem for input reshape']
    %s3 = ssub.s32 16, 1
    %v4 = vld [vmem:[%s0] sm:%s3]
    %5 = vst [vmem:[#allocation1] sm:%s3] %v4
    %v6 = vld [vmem:[#allocation1] sm:$0x1]
    %vm7 = vcmask 261120
    %8 = vst.msk [vmem:[#allocation0] sm:$0x1] %vm7, %v6
    %s9 = scalar_lea.vmem [#allocation1], 3
    %v10 = vld [vmem:[%s9] sm:$0x1]
    %11 = vrot.lane.b32.xlu0 %v10, 96
    %v12 = vpop.permute.xlu0 %11
    %vm13 = vcmask 1048320
    %14 = vst.msk [vmem:[#allocation0] sm:$0x1] %vm13, %v12
    %s15 = scalar_lea.vmem [#allocation1], 2
    %v16 = vld [vmem:[%s15] sm:$0x1]
    %17 = vrot.lane.b32.xlu0 %v16, 64
    %v18 = vpop.permute.xlu0 %17
    %vm19 = vcmask 785920
    %20 = vst.msk [vmem:[#allocation0] sm:$0x1] %vm19, %v18
    %s21 = scalar_lea.vmem [#allocation1], 1
    %v22 = vld [vmem:[%s21] sm:$0x1]
    %23 = vrot.lane.b32.xlu0 %v22, 32
    %v24 = vpop.permute.xlu0 %23
    %vm25 = vcmask 523520
    %26 = vst.msk [vmem:[#allocation0] sm:$0x1] %vm25, %v24
    %s28 = ssub.s32 2, 1
    %v29 = vld [vmem:[#allocation0] sm:%s28]
    %s31 = ssub.s32 2, 1
    %32 = vst [vmem:[%s1] sm:%s31] %v29

// kernel: tile.18
$region0: #{tile.18}
  #allocation0 [shape = 's32[1]{0}', space=sflag, size = 0x4, scoped, tag = 'scoped memory for tile.18']
  %s0 = inlined_call_operand.vmem [shape: f32[4], index: 0, kind: input, shape index: {}]
  %s1 = inlined_call_operand.vmem [shape: f32[4,4], index: 1, kind: output, shape index: {}]
  // Predicated region
  $region2: #{tile.18} parent=0 // pred_check
    _
  $region3: #{tile.18} parent=0 // pred_check_branch
    %3 = sbr.rel (0) target = $region5
  $region4: #{tile.18} parent=0 // pred_region
    _
  $region5: #{tile.18} parent=0 // pred_fallthru
    _
  %v4 = vld [vmem:[%s0] ss:$0 sm:$0xff]
  %5 = vst [vmem:[%s1] sm:$0xf] %v4

// kernel: tile.19
$region0: #{tile.19}
  %s0 = inlined_call_operand.vmem [shape: f32[4,4], index: 0, kind: input, shape index: {}]
  %s1 = inlined_call_operand.vmem [shape: f32[1,16], index: 1, kind: output, shape index: {}]
  $region1: #{tile.19} parent=0
    #allocation0 [shape = 'u8[4096]{0}', space=vmem, size = 0x1000, scoped, tag = 'scoped mem for output reshape']
    #allocation1 [shape = 'u8[4096]{0}', space=vmem, size = 0x1000, scoped, tag = 'scoped mem for input reshape']
    %s3 = ssub.s32 16, 1
    %v4 = vld [vmem:[%s0] sm:%s3]
    %5 = vst [vmem:[#allocation1] sm:%s3] %v4
    %v6 = vld [vmem:[#allocation1] sm:$0x1]
    %vm7 = vcmask 31744
    %8 = vst.msk [vmem:[#allocation0] sm:$0x1] %vm7, %v6
    %s9 = scalar_lea.vmem [#allocation1], 3
    %v10 = vld [vmem:[%s9] sm:$0x1]
    %11 = vrot.lane.b32.xlu0 %v10, 12
    %v12 = vpop.permute.xlu0 %11
    %vm13 = vcmask 130144
    %14 = vst.msk [vmem:[#allocation0] sm:$0x1] %vm13, %v12
    %s15 = scalar_lea.vmem [#allocation1], 2
    %v16 = vld [vmem:[%s15] sm:$0x1]
    %17 = vrot.lane.b32.xlu0 %v16, 8
    %v18 = vpop.permute.xlu0 %17
    %vm19 = vcmask 97344
    %20 = vst.msk [vmem:[#allocation0] sm:$0x1] %vm19, %v18
    %s21 = scalar_lea.vmem [#allocation1], 1
    %v22 = vld [vmem:[%s21] sm:$0x1]
    %23 = vrot.lane.b32.xlu0 %v22, 4
    %v24 = vpop.permute.xlu0 %23
    %vm25 = vcmask 64544
    %26 = vst.msk [vmem:[#allocation0] sm:$0x1] %vm25, %v24
    %s28 = ssub.s32 2, 1
    %v29 = vld [vmem:[#allocation0] sm:%s28]
    %s31 = ssub.s32 2, 1
    %32 = vst [vmem:[%s1] sm:%s31] %v29

// kernel: rodt_forest_bagging_forward.1
$region0: #{rodt_forest_bagging_forward.1}
  #allocation0 [shape = 'u32[]', space=smem, size = 0x4, offset = 0x4, fixed_abs, tag = 'smem constant byte address 0x4 - core index']
  #allocation1 [shape = 'u32[72,128]{1,0:T(1,128)}', space=vmem, size = 0x9000, scoped, tag = 'internal scratch']
  %s0 = inlined_call_operand.vmem [shape: f32[8,128], index: 0, kind: input, shape index: {}]
  %s1 = inlined_call_operand.vmem [shape: bf16[128,128], index: 1, kind: input, shape index: {}]
  %s2 = inlined_call_operand.vmem [shape: bf16[128,128], index: 2, kind: input, shape index: {}]
  %s3 = inlined_call_operand.vmem [shape: f32[1,128], index: 3, kind: input, shape index: {}]
  %s4 = inlined_call_operand.vmem [shape: bf16[128,16], index: 4, kind: input, shape index: {}]
  %s5 = inlined_call_operand.vmem [shape: f32[1,16], index: 5, kind: input, shape index: {}]
  %s6 = inlined_call_operand.vmem [shape: f32[8,16], index: 6, kind: output, shape index: {}]
  %s7 = sld [smem:[#allocation0]]
  $region34: #{rodt_forest_bagging_forward.1} parent=0
    _
  %s9 = ssub.s32 1, %s7
  %s10 = scalar_select 0, %s9, %s7
  // Predicated region
  $region2: #{rodt_forest_bagging_forward.1} parent=0 // pred_check
    _
  $region3: #{rodt_forest_bagging_forward.1} parent=0 // pred_check_branch
    %12 = sbr.rel (0) target = $region5
  $region4: #{rodt_forest_bagging_forward.1} parent=0 // pred_region
    _
  $region5: #{rodt_forest_bagging_forward.1} parent=0 // pred_fallthru
    _
  // Predicated region
  $region6: #{rodt_forest_bagging_forward.1} parent=0 // pred_check
    _
  $region7: #{rodt_forest_bagging_forward.1} parent=0 // pred_check_branch
    %14 = sbr.rel (0) target = $region9
  $region8: #{rodt_forest_bagging_forward.1} parent=0 // pred_region
    _
  $region9: #{rodt_forest_bagging_forward.1} parent=0 // pred_fallthru
    _
  // Predicated region
  $region10: #{rodt_forest_bagging_forward.1} parent=0 // pred_check
    _
  $region11: #{rodt_forest_bagging_forward.1} parent=0 // pred_check_branch
    %16 = sbr.rel (0) target = $region13
  $region12: #{rodt_forest_bagging_forward.1} parent=0 // pred_region
    _
  $region13: #{rodt_forest_bagging_forward.1} parent=0 // pred_fallthru
    _
  // Predicated region
  $region14: #{rodt_forest_bagging_forward.1} parent=0 // pred_check
    _
  $region15: #{rodt_forest_bagging_forward.1} parent=0 // pred_check_branch
    %18 = sbr.rel (0) target = $region17
  $region16: #{rodt_forest_bagging_forward.1} parent=0 // pred_region
    _
  $region17: #{rodt_forest_bagging_forward.1} parent=0 // pred_fallthru
    _
  // Predicated region
  $region18: #{rodt_forest_bagging_forward.1} parent=0 // pred_check
    _
  $region19: #{rodt_forest_bagging_forward.1} parent=0 // pred_check_branch
    %20 = sbr.rel (0) target = $region21
  $region20: #{rodt_forest_bagging_forward.1} parent=0 // pred_region
    _
  $region21: #{rodt_forest_bagging_forward.1} parent=0 // pred_fallthru
    _
  // Predicated region
  $region22: #{rodt_forest_bagging_forward.1} parent=0 // pred_check
    _
  $region23: #{rodt_forest_bagging_forward.1} parent=0 // pred_check_branch
    %22 = sbr.rel (0) target = $region25
  $region24: #{rodt_forest_bagging_forward.1} parent=0 // pred_region
    _
  $region25: #{rodt_forest_bagging_forward.1} parent=0 // pred_fallthru
    _
  %v23 = vld [vmem:[%s0] sm:$0xff]
  %v24 = vld [vmem:[%s1] sm:$0xf]
  %v25 = vld [vmem:[%s1 + $0x4] sm:$0xf]
  %v26 = vld [vmem:[%s1 + $0x8] sm:$0xf]
  %v27 = vld [vmem:[%s1 + $0xc] sm:$0xf]
  %v28 = vld [vmem:[%s1 + $0x10] sm:$0xf]
  %v29 = vld [vmem:[%s1 + $0x14] sm:$0xf]
  %v30 = vld [vmem:[%s1 + $0x18] sm:$0xf]
  %v31 = vld [vmem:[%s1 + $0x1c] sm:$0xf]
  %v32 = vld [vmem:[%s1 + $0x20] sm:$0xf]
  %v33 = vld [vmem:[%s1 + $0x24] sm:$0xf]
  %v34 = vld [vmem:[%s1 + $0x28] sm:$0xf]
  %v35 = vld [vmem:[%s1 + $0x2c] sm:$0xf]
  %v36 = vld [vmem:[%s1 + $0x30] sm:$0xf]
  %v37 = vld [vmem:[%s1 + $0x34] sm:$0xf]
  %v38 = vld [vmem:[%s1 + $0x38] sm:$0xf]
  %v39 = vld [vmem:[%s1 + $0x3c] sm:$0xf]
  %v40 = vpack.c.bf16 %v23, %v23
  %v57 = vunpack.c.l.b16 %v24
  %v58 = vunpack.c.l.b16 %v25
  %v59 = vunpack.c.l.b16 %v26
  %v60 = vunpack.c.l.b16 %v27
  %v61 = vunpack.c.l.b16 %v28
  %v62 = vunpack.c.l.b16 %v29
  %v63 = vunpack.c.l.b16 %v30
  %v64 = vunpack.c.l.b16 %v31
  %v65 = vunpack.c.l.b16 %v32
  %v66 = vunpack.c.l.b16 %v33
  %v67 = vunpack.c.l.b16 %v34
  %v68 = vunpack.c.l.b16 %v35
  %v69 = vunpack.c.l.b16 %v36
  %v70 = vunpack.c.l.b16 %v37
  %v71 = vunpack.c.l.b16 %v38
  %v72 = vunpack.c.l.b16 %v39
  %v73 = vpack.c.b16 %v58, %v57
  %v74 = vpack.c.b16 %v60, %v59
  %v75 = vpack.c.b16 %v62, %v61
  %v76 = vpack.c.b16 %v64, %v63
  %v77 = vpack.c.b16 %v66, %v65
  %v78 = vpack.c.b16 %v68, %v67
  %v79 = vpack.c.b16 %v70, %v69
  %v80 = vpack.c.b16 %v72, %v71
  %89 = vmatpush.bf16.msra.mxu0 %v80
  %90 = vmatpush.bf16.msra.mxu0 %v79
  %91 = vmatpush.bf16.msra.mxu0 %v78
  %92 = vmatpush.bf16.msra.mxu0 %v77
  %93 = vmatpush.bf16.msra.mxu0 %v76
  %94 = vmatpush.bf16.msra.mxu0 %v75
  %95 = vmatpush.bf16.msra.mxu0 %v74
  %96 = vmatpush.bf16.msra.mxu0 %v73
  %97 = vmatmul.bf16.gmra.mxu0 %v40
  %v98 = vpop.f32.mrf.mxu0
  %v99 = vadd.f32 0.0, %v98
  %v100 = vpop.f32.mrf.mxu0
  %101 = vdwg.mxu0
  %v102 = vsub.f32 %v23, %v99
  %v103 = vmul.f32 %v102, %v102
  %v104 = vpack.c.bf16 %v103, %v103
  %105 = vmatpush.bf16.msra.mxu0 %v80
  %106 = vmatpush.bf16.msra.mxu0 %v79
  %107 = vmatpush.bf16.msra.mxu0 %v78
  %108 = vmatpush.bf16.msra.mxu0 %v77
  %109 = vmatpush.bf16.msra.mxu0 %v76
  %110 = vmatpush.bf16.msra.mxu0 %v75
  %111 = vmatpush.bf16.msra.mxu0 %v74
  %112 = vmatpush.bf16.msra.mxu0 %v73
  %113 = vmatmul.bf16.gmra.mxu0 %v104
  %v114 = vpop.f32.mrf.mxu0
  %v115 = vadd.f32 1e-05, %v114
  %v116 = vpop.f32.mrf.mxu0
  %117 = vdwg.mxu0
  %v118 = vrsqrt.pop %v115
  %v119 = vmul.f32 %v118, %v115
  %v120 = vmul.f32 %v119, %v118
  %v121 = vmul.f32 0.5, %v120
  %v122 = vsub.f32 1.5, %v121
  %v123 = vmul.f32 %v118, %v122
  %vm124 = vweird.f32 %v115
  %vm125 = vweird.f32 %v118
  %vm126 = vmor %vm124, %vm125
  %v127 = vsel %vm126, %v118, %v123
  %v128 = vmul.f32 %v102, %v127
  %v129 = vpack.c.bf16 %v128, %v128
  %v130 = vld [vmem:[%s2] sm:$0xf]
  %v131 = vld [vmem:[%s2 + $0x4] sm:$0xf]
  %v132 = vld [vmem:[%s2 + $0x8] sm:$0xf]
  %v133 = vld [vmem:[%s2 + $0xc] sm:$0xf]
  %v134 = vld [vmem:[%s2 + $0x10] sm:$0xf]
  %v135 = vld [vmem:[%s2 + $0x14] sm:$0xf]
  %v136 = vld [vmem:[%s2 + $0x18] sm:$0xf]
  %v137 = vld [vmem:[%s2 + $0x1c] sm:$0xf]
  %v138 = vld [vmem:[%s2 + $0x20] sm:$0xf]
  %v139 = vld [vmem:[%s2 + $0x24] sm:$0xf]
  %v140 = vld [vmem:[%s2 + $0x28] sm:$0xf]
  %v141 = vld [vmem:[%s2 + $0x2c] sm:$0xf]
  %v142 = vld [vmem:[%s2 + $0x30] sm:$0xf]
  %v143 = vld [vmem:[%s2 + $0x34] sm:$0xf]
  %v144 = vld [vmem:[%s2 + $0x38] sm:$0xf]
  %v145 = vld [vmem:[%s2 + $0x3c] sm:$0xf]
  %v146 = vld [vmem:[%s3] sm:$0x1]
  %v148 = vperm.slane %v146, 0
  %v166 = vunpack.c.l.b16 %v130
  %v167 = vunpack.c.l.b16 %v131
  %v168 = vunpack.c.l.b16 %v132
  %v169 = vunpack.c.l.b16 %v133
  %v170 = vunpack.c.l.b16 %v134
  %v171 = vunpack.c.l.b16 %v135
  %v172 = vunpack.c.l.b16 %v136
  %v173 = vunpack.c.l.b16 %v137
  %v174 = vunpack.c.l.b16 %v138
  %v175 = vunpack.c.l.b16 %v139
  %v176 = vunpack.c.l.b16 %v140
  %v177 = vunpack.c.l.b16 %v141
  %v178 = vunpack.c.l.b16 %v142
  %v179 = vunpack.c.l.b16 %v143
  %v180 = vunpack.c.l.b16 %v144
  %v181 = vunpack.c.l.b16 %v145
  %v182 = vpack.c.b16 %v167, %v166
  %v183 = vpack.c.b16 %v169, %v168
  %v184 = vpack.c.b16 %v171, %v170
  %v185 = vpack.c.b16 %v173, %v172
  %v186 = vpack.c.b16 %v175, %v174
  %v187 = vpack.c.b16 %v177, %v176
  %v188 = vpack.c.b16 %v179, %v178
  %v189 = vpack.c.b16 %v181, %v180
  %198 = vmatpush.bf16.msra.mxu0 %v189
  %199 = vmatpush.bf16.msra.mxu0 %v188
  %200 = vmatpush.bf16.msra.mxu0 %v187
  %201 = vmatpush.bf16.msra.mxu0 %v186
  %202 = vmatpush.bf16.msra.mxu0 %v185
  %203 = vmatpush.bf16.msra.mxu0 %v184
  %204 = vmatpush.bf16.msra.mxu0 %v183
  %205 = vmatpush.bf16.msra.mxu0 %v182
  %206 = vmatmul.bf16.gmra.mxu0 %v129
  %v207 = vpop.f32.mrf.mxu0
  %v208 = vadd.f32 %v148, %v207
  %v209 = vpop.f32.mrf.mxu0
  %210 = vdwg.mxu0
  %v211 = vmax.f32 %v208, 0.0
  %v212 = vpack.c.bf16 %v211, %v211
  %213 = vmatpush.bf16.msra.mxu0 %v80
  %214 = vmatpush.bf16.msra.mxu0 %v79
  %215 = vmatpush.bf16.msra.mxu0 %v78
  %216 = vmatpush.bf16.msra.mxu0 %v77
  %217 = vmatpush.bf16.msra.mxu0 %v76
  %218 = vmatpush.bf16.msra.mxu0 %v75
  %219 = vmatpush.bf16.msra.mxu0 %v74
  %220 = vmatpush.bf16.msra.mxu0 %v73
  %221 = vmatmul.bf16.gmra.mxu0 %v212
  %v222 = vpop.f32.mrf.mxu0
  %v223 = vadd.f32 0.0, %v222
  %v224 = vpop.f32.mrf.mxu0
  %225 = vdwg.mxu0
  %v226 = vsub.f32 %v211, %v223
  %v227 = vmul.f32 %v226, %v226
  %v228 = vpack.c.bf16 %v227, %v227
  %229 = vmatpush.bf16.msra.mxu0 %v80
  %230 = vmatpush.bf16.msra.mxu0 %v79
  %231 = vmatpush.bf16.msra.mxu0 %v78
  %232 = vmatpush.bf16.msra.mxu0 %v77
  %233 = vmatpush.bf16.msra.mxu0 %v76
  %234 = vmatpush.bf16.msra.mxu0 %v75
  %235 = vmatpush.bf16.msra.mxu0 %v74
  %236 = vmatpush.bf16.msra.mxu0 %v73
  %237 = vmatmul.bf16.gmra.mxu0 %v228
  %v238 = vpop.f32.mrf.mxu0
  %v239 = vadd.f32 1e-05, %v238
  %v240 = vpop.f32.mrf.mxu0
  %241 = vdwg.mxu0
  %v242 = vrsqrt.pop %v239
  %v243 = vmul.f32 %v242, %v239
  %v244 = vmul.f32 %v243, %v242
  %v245 = vmul.f32 0.5, %v244
  %v246 = vsub.f32 1.5, %v245
  %v247 = vmul.f32 %v242, %v246
  %vm248 = vweird.f32 %v239
  %vm249 = vweird.f32 %v242
  %vm250 = vmor %vm248, %vm249
  %v251 = vsel %vm250, %v242, %v247
  %v252 = vmul.f32 %v226, %v251
  %v253 = vpack.c.bf16 %v252, %v252
  %v254 = vld [vmem:[%s4] sm:$0xf]
  %v255 = vld [vmem:[%s4 + $0x4] sm:$0xf]
  %v256 = vld [vmem:[%s4 + $0x8] sm:$0xf]
  %v257 = vld [vmem:[%s4 + $0xc] sm:$0xf]
  %v258 = vld [vmem:[%s4 + $0x10] sm:$0xf]
  %v259 = vld [vmem:[%s4 + $0x14] sm:$0xf]
  %v260 = vld [vmem:[%s4 + $0x18] sm:$0xf]
  %v261 = vld [vmem:[%s4 + $0x1c] sm:$0xf]
  %v262 = vld [vmem:[%s4 + $0x20] sm:$0xf]
  %v263 = vld [vmem:[%s4 + $0x24] sm:$0xf]
  %v264 = vld [vmem:[%s4 + $0x28] sm:$0xf]
  %v265 = vld [vmem:[%s4 + $0x2c] sm:$0xf]
  %v266 = vld [vmem:[%s4 + $0x30] sm:$0xf]
  %v267 = vld [vmem:[%s4 + $0x34] sm:$0xf]
  %v268 = vld [vmem:[%s4 + $0x38] sm:$0xf]
  %v269 = vld [vmem:[%s4 + $0x3c] sm:$0xf]
  %v270 = vld [vmem:[%s5] sm:$0x1]
  %v272 = vperm.slane %v270, 0
  %v290 = vunpack.c.l.b16 %v254
  %v291 = vunpack.c.l.b16 %v255
  %v292 = vunpack.c.l.b16 %v256
  %v293 = vunpack.c.l.b16 %v257
  %v294 = vunpack.c.l.b16 %v258
  %v295 = vunpack.c.l.b16 %v259
  %v296 = vunpack.c.l.b16 %v260
  %v297 = vunpack.c.l.b16 %v261
  %v298 = vunpack.c.l.b16 %v262
  %v299 = vunpack.c.l.b16 %v263
  %v300 = vunpack.c.l.b16 %v264
  %v301 = vunpack.c.l.b16 %v265
  %v302 = vunpack.c.l.b16 %v266
  %v303 = vunpack.c.l.b16 %v267
  %v304 = vunpack.c.l.b16 %v268
  %v305 = vunpack.c.l.b16 %v269
  %v306 = vpack.c.b16 %v291, %v290
  %v307 = vpack.c.b16 %v293, %v292
  %v308 = vpack.c.b16 %v295, %v294
  %v309 = vpack.c.b16 %v297, %v296
  %v310 = vpack.c.b16 %v299, %v298
  %v311 = vpack.c.b16 %v301, %v300
  %v312 = vpack.c.b16 %v303, %v302
  %v313 = vpack.c.b16 %v305, %v304
  %322 = vmatpush.bf16.msra.mxu0 %v313
  %323 = vmatpush.bf16.msra.mxu0 %v312
  %324 = vmatpush.bf16.msra.mxu0 %v311
  %325 = vmatpush.bf16.msra.mxu0 %v310
  %326 = vmatpush.bf16.msra.mxu0 %v309
  %327 = vmatpush.bf16.msra.mxu0 %v308
  %328 = vmatpush.bf16.msra.mxu0 %v307
  %329 = vmatpush.bf16.msra.mxu0 %v306
  %330 = vmatmul.bf16.gmra.mxu0 %v253
  %v331 = vpop.f32.mrf.mxu0
  %v332 = vadd.f32 %v272, %v331
  %v333 = vpop.f32.mrf.mxu0
  %334 = vdwg.mxu0
  %vm335 = vcmask 130048
  %336 = vst.msk [vmem:[%s6] sm:$0xff] %vm335, %v332
  // Predicated region
  $region26: #{rodt_forest_bagging_forward.1} parent=0 // pred_check
    _
  $region27: #{rodt_forest_bagging_forward.1} parent=0 // pred_check_branch
    %338 = sbr.rel (0) target = $region29
  $region28: #{rodt_forest_bagging_forward.1} parent=0 // pred_region
    _
  $region29: #{rodt_forest_bagging_forward.1} parent=0 // pred_fallthru
    _
  // Predicated region
  $region30: #{rodt_forest_bagging_forward.1} parent=0 // pred_check
    _
  $region31: #{rodt_forest_bagging_forward.1} parent=0 // pred_check_branch
    %340 = sbr.rel (0) target = $region33
  $region32: #{rodt_forest_bagging_forward.1} parent=0 // pred_region
    _
  $region33: #{rodt_forest_bagging_forward.1} parent=0 // pred_fallthru
    _

</llo_original>
